<compile_context>
chip_gen: v7x
topology: tpu7x:2x2x1
jax: 0.10.0
libtpu: 0.0.40
codegen_flags: <defaults>
</compile_context>

<pallas_src>
import jax
import jax.numpy as jnp
from jax.experimental import pallas as pl
from jax.experimental.pallas import tpu as pltpu


def _round_up(a: int, b: int) -> int:
    return (a + b - 1) // b * b


# ----------------------------------------------------------------------------
# Kernels
# ----------------------------------------------------------------------------
def _ffn_kernel_resident(x_ref, w1_ref, b1_ref, w2_ref, b2_ref, o_ref):
    """Fused single pass: weights are fully VMEM-resident.  Grid = (M // tm,)."""
    x = x_ref[...]                                                   # [tm, D]
    h = jnp.dot(x, w1_ref[...], preferred_element_type=jnp.float32)  # [tm, F]
    h = jnp.maximum(h + b1_ref[...], 0.0)
    out = jnp.dot(h.astype(w2_ref.dtype), w2_ref[...],
                  preferred_element_type=jnp.float32)                # [tm, D]
    o_ref[...] = (out + b2_ref[...]).astype(o_ref.dtype)


def _ffn_kernel_streamed(x_ref, w1_ref, b1_ref, w2_ref, b2_ref, o_ref, acc_ref):
    """Streamed d_ff: Grid = (M // tm, F // tf), f32 accumulator over f."""
    f = pl.program_id(1)

    @pl.when(f == 0)
    def _():
        acc_ref[...] = jnp.zeros_like(acc_ref)

    x = x_ref[...]                                                   # [tm, D]
    h = jnp.dot(x, w1_ref[...], preferred_element_type=jnp.float32)  # [tm, tf]
    h = jnp.maximum(h + b1_ref[...], 0.0)
    acc_ref[...] += jnp.dot(h.astype(w2_ref.dtype), w2_ref[...],
                            preferred_element_type=jnp.float32)      # [tm, D]

    @pl.when(f == pl.num_programs(1) - 1)
    def _():
        o_ref[...] = (acc_ref[...] + b2_ref[...]).astype(o_ref.dtype)


# ----------------------------------------------------------------------------
# Wrapper
# ----------------------------------------------------------------------------
def positionwise_feed_forward(x, w1, b1, w2, b2, *,
                              tile_m=512, tile_f=512,
                              compute_dtype=jnp.bfloat16,
                              max_resident_weight_bytes=16 * 1024 * 1024):
    """
    Args:
      x:  [batch, seq, d_model]
      w1: [d_model, d_ff],  b1: [d_ff]
      w2: [d_ff, d_model],  b2: [d_model]
      tile_m: row tile (rounded to a multiple of 16)
      tile_f: d_ff tile for the streamed path (multiple of 128)
      compute_dtype: dtype fed to the MXU (bf16 default; accumulation is f32)
      max_resident_weight_bytes: if W1+W2 (in compute dtype) fit this budget,
        keep them VMEM-resident and collapse the d_ff grid axis.
    Returns:
      [batch, seq, d_model] in x.dtype
    """
    B, S, D = x.shape
    F = w1.shape[1]
    M = B * S
    out_dtype = x.dtype
    cdtype = jnp.dtype(compute_dtype)
    cbytes = cdtype.itemsize
    obytes = jnp.dtype(out_dtype).itemsize

    LANE, SUB = 128, 16
    Dp = _round_up(D, LANE)
    Fp = _round_up(F, LANE)

    # Row tile: always a multiple of 16, M padded to a multiple of tm.
    tm = _round_up(min(tile_m, _round_up(M, SUB)), SUB)
    Mp = _round_up(M, tm)

    weight_bytes = 2 * Dp * Fp * cbytes          # W1 + W2 (single copy)
    resident = weight_bytes <= max_resident_weight_bytes

    if resident:
        tf = Fp
    else:
        tf = _round_up(min(tile_f, Fp), LANE)
        Fp = _round_up(Fp, tf)

    # Zero-padding is exact for this FFN (pads propagate as zeros), cast to bf16.
    x2d = x.reshape(M, D)
    if (Mp, Dp) != (M, D):
        x2d = jnp.pad(x2d, ((0, Mp - M), (0, Dp - D)))
    x2d = x2d.astype(cdtype)
    w1p = w1 if (Dp, Fp) == (D, F) else jnp.pad(w1, ((0, Dp - D), (0, Fp - F)))
    w2p = w2 if (Fp, Dp) == (F, D) else jnp.pad(w2, ((0, Fp - F), (0, Dp - D)))
    w1p = w1p.astype(cdtype)
    w2p = w2p.astype(cdtype)
    b1p = (b1 if Fp == F else jnp.pad(b1, (0, Fp - F))).astype(jnp.float32).reshape(1, Fp)
    b2p = (b2 if Dp == D else jnp.pad(b2, (0, Dp - D))).astype(jnp.float32).reshape(1, Dp)

    n_row_tiles = Mp // tm
    flops = 4 * Mp * Fp * Dp                      # two matmuls, 2 flop/MAC

    def _vmem_limit(total_bytes):
        lim = int(total_bytes * 1.3) + (1 << 20)
        return min(max(lim, 32 * 1024 * 1024), 127 * 1024 * 1024)

    if resident:
        # Footprint: 2x x tile, 2x weights (pipelining buffers), 2x out tile,
        # the f32 (tm, Fp) activation intermediate, biases.
        vmem_bytes = (2 * tm * Dp * cbytes
                      + 2 * (Dp * Fp + Fp * Dp) * cbytes
                      + 2 * tm * Dp * obytes
                      + tm * Fp * 4
                      + 2 * (Fp + Dp) * 4)
        bytes_accessed = (Mp * Dp * cbytes + Mp * Dp * obytes
                          + (Dp * Fp + Fp * Dp) * cbytes + (Fp + Dp) * 4)
        out2d = pl.pallas_call(
            _ffn_kernel_resident,
            out_shape=jax.ShapeDtypeStruct((Mp, Dp), out_dtype),
            grid_spec=pltpu.PrefetchScalarGridSpec(
                num_scalar_prefetch=0,
                grid=(n_row_tiles,),
                in_specs=[
                    pl.BlockSpec((tm, Dp), lambda i: (i, 0)),    # x row tile
                    pl.BlockSpec((Dp, Fp), lambda i: (0, 0)),    # W1 resident
                    pl.BlockSpec((1, Fp), lambda i: (0, 0)),     # b1 resident
                    pl.BlockSpec((Fp, Dp), lambda i: (0, 0)),    # W2 resident
                    pl.BlockSpec((1, Dp), lambda i: (0, 0)),     # b2 resident
                ],
                out_specs=pl.BlockSpec((tm, Dp), lambda i: (i, 0)),
            ),
            compiler_params=pltpu.CompilerParams(
                dimension_semantics=("parallel",),
                vmem_limit_bytes=_vmem_limit(vmem_bytes)),
            cost_estimate=pl.CostEstimate(flops=flops, transcendentals=0,
                                          bytes_accessed=bytes_accessed),
        )(x2d, w1p, b1p, w2p, b2p)
    else:
        # Footprint: 2x x, 2x W1 tile, 2x W2 tile, 2x out, f32 accumulator, biases.
        vmem_bytes = (2 * tm * Dp * cbytes
                      + 2 * Dp * tf * cbytes
                      + 2 * tf * Dp * cbytes
                      + 2 * tm * Dp * obytes
                      + tm * Dp * 4
                      + 2 * (tf + Dp) * 4)
        bytes_accessed = (Mp * Dp * cbytes + Mp * Dp * obytes
                          + n_row_tiles * (Dp * Fp + Fp * Dp) * cbytes
                          + (Fp + Dp) * 4)
        out2d = pl.pallas_call(
            _ffn_kernel_streamed,
            out_shape=jax.ShapeDtypeStruct((Mp, Dp), out_dtype),
            grid_spec=pltpu.PrefetchScalarGridSpec(
                num_scalar_prefetch=0,
                grid=(n_row_tiles, Fp // tf),
                in_specs=[
                    pl.BlockSpec((tm, Dp), lambda i, f: (i, 0)),   # x row tile
                    pl.BlockSpec((Dp, tf), lambda i, f: (0, f)),   # W1 column tile
                    pl.BlockSpec((1, tf), lambda i, f: (0, f)),    # b1 slice
                    pl.BlockSpec((tf, Dp), lambda i, f: (f, 0)),   # W2 row tile
                    pl.BlockSpec((1, Dp), lambda i, f: (0, 0)),    # b2 resident
                ],
                out_specs=pl.BlockSpec((tm, Dp), lambda i, f: (i, 0)),
                scratch_shapes=[pltpu.VMEM((tm, Dp), jnp.float32)],
            ),
            compiler_params=pltpu.CompilerParams(
                dimension_semantics=("parallel", "arbitrary"),
                vmem_limit_bytes=_vmem_limit(vmem_bytes)),
            cost_estimate=pl.CostEstimate(flops=flops, transcendentals=0,
                                          bytes_accessed=bytes_accessed),
        )(x2d, w1p, b1p, w2p, b2p)

    return out2d[:M, :D].reshape(B, S, D)


# ----------------------------------------------------------------------------
# Reference + params
# ----------------------------------------------------------------------------
def init_params(key, d_model, d_ff, dtype=jnp.float32):
    """Deterministic nn.Linear-style init: U(-1/sqrt(fan_in), 1/sqrt(fan_in))."""
    k1, k2, k3, k4 = jax.random.split(key, 4)
    lim1 = 1.0 / (d_model ** 0.5)
    lim2 = 1.0 / (d_ff ** 0.5)
    w1 = jax.random.uniform(k1, (d_model, d_ff), dtype, -lim1, lim1)
    b1 = jax.random.uniform(k2, (d_ff,), dtype, -lim1, lim1)
    w2 = jax.random.uniform(k3, (d_ff, d_model), dtype, -lim2, lim2)
    b2 = jax.random.uniform(k4, (d_model,), dtype, -lim2, lim2)
    return w1, b1, w2, b2


def _reference(x, w1, b1, w2, b2):
    hp = jax.lax.Precision.HIGHEST
    h = jnp.maximum(jnp.dot(x, w1, precision=hp) + b1, 0.0)
    return jnp.dot(h, w2, precision=hp) + b2


if __name__ == "__main__":
    key = jax.random.PRNGKey(0)

    # --- Test 1: small shapes, f32 compute (tight check; exercises padding) ---
    batch, seq, d_model, d_ff = 2, 8, 32, 64
    kx, kp, key = jax.random.split(key, 3)
    x = jax.random.normal(kx, (batch, seq, d_model), jnp.float32)
    w1, b1, w2, b2 = init_params(kp, d_model, d_ff)
    out = positionwise_feed_forward(x, w1, b1, w2, b2, compute_dtype=jnp.float32)
    out = jax.block_until_ready(out)
    ref = _reference(x, w1, b1, w2, b2)
    assert out.shape == (batch, seq, d_model)
    assert jnp.allclose(out, ref, atol=1e-5, rtol=1e-5), "mismatch (small f32 case)"

    # --- Test 2: resident-weight bf16 fast path, multiple row tiles ---
    batch, seq, d_model, d_ff = 2, 128, 128, 512
    kx, kp, key = jax.random.split(key, 3)
    x = jax.random.normal(kx, (batch, seq, d_model), jnp.float32)
    w1, b1, w2, b2 = init_params(kp, d_model, d_ff)
    out = positionwise_feed_forward(x, w1, b1, w2, b2, tile_m=128)  # bf16 default
    out = jax.block_until_ready(out)
    ref = _reference(x, w1, b1, w2, b2)
    assert out.shape == (batch, seq, d_model)
    assert jnp.allclose(out, ref, atol=3e-2, rtol=3e-2), "mismatch (resident bf16 case)"

    # --- Test 3: forced streamed d_ff path (accumulator), f32 compute, tight check ---
    out = positionwise_feed_forward(x, w1, b1, w2, b2, tile_m=128, tile_f=256,
                                    compute_dtype=jnp.float32,
                                    max_resident_weight_bytes=0)
    out = jax.block_until_ready(out)
    assert jnp.allclose(out, ref, atol=1e-4, rtol=1e-4), "mismatch (streamed f32 case)"

    print("KERNEL_OK")
</pallas_src>

<mosaic_0001>
module attributes {stable_mosaic.version = 11 : i64} {
  func.func @_ffn_kernel_resident(%arg0: i32, %arg1: memref<16x128xf32, #tpu.memory_space<vmem>>, %arg2: memref<128x128xf32, #tpu.memory_space<vmem>>, %arg3: memref<1x128xf32, #tpu.memory_space<vmem>>, %arg4: memref<128x128xf32, #tpu.memory_space<vmem>>, %arg5: memref<1x128xf32, #tpu.memory_space<vmem>>, %arg6: memref<16x128xf32, #tpu.memory_space<vmem>>) attributes {dimension_semantics = [#tpu.dimension_semantics<parallel>], iteration_bounds = array<i64: 1>, scalar_prefetch = 0 : i64, scratch_operands = 0 : i64, tpu.core_type = #tpu.core_type<tc>, window_params = [{transform_indices = @transform_0, window_bounds = array<i64: 16, 128>}, {pipeline_mode = #tpu.pipeline_mode<synchronous>, transform_indices = @transform_1, window_bounds = array<i64: 128, 128>}, {pipeline_mode = #tpu.pipeline_mode<synchronous>, transform_indices = @transform_2, window_bounds = array<i64: 1, 128>}, {pipeline_mode = #tpu.pipeline_mode<synchronous>, transform_indices = @transform_3, window_bounds = array<i64: 128, 128>}, {pipeline_mode = #tpu.pipeline_mode<synchronous>, transform_indices = @transform_4, window_bounds = array<i64: 1, 128>}, {transform_indices = @transform_5, window_bounds = array<i64: 16, 128>}]} {
    %c0 = arith.constant 0 : index
    %c0_0 = arith.constant 0 : index
    %0 = vector.load %arg1[%c0, %c0_0] : memref<16x128xf32, #tpu.memory_space<vmem>>, vector<16x128xf32>
    %c0_1 = arith.constant 0 : index
    %c0_2 = arith.constant 0 : index
    %1 = vector.load %arg2[%c0_1, %c0_2] : memref<128x128xf32, #tpu.memory_space<vmem>>, vector<128x128xf32>
    %cst = arith.constant dense<0.000000e+00> : vector<16x128xf32>
    %2 = tpu.matmul %0, %1, %cst {dimension_numbers = #tpu.dot_dimension_numbers<[1], [0], [0], [1], [0, 0, 1, 1], [], []>} : vector<16x128xf32>, vector<128x128xf32>, vector<16x128xf32> -> vector<16x128xf32>
    %c0_3 = arith.constant 0 : index
    %c0_4 = arith.constant 0 : index
    %3 = vector.load %arg3[%c0_3, %c0_4] : memref<1x128xf32, #tpu.memory_space<vmem>>, vector<1x128xf32>
    %4 = vector.broadcast %3 : vector<1x128xf32> to vector<16x128xf32>
    %5 = arith.addf %2, %4 : vector<16x128xf32>
    %cst_5 = arith.constant 0.000000e+00 : f32
    %6 = vector.broadcast %cst_5 : f32 to vector<16x128xf32>
    %7 = arith.maximumf %5, %6 : vector<16x128xf32>
    %c0_6 = arith.constant 0 : index
    %c0_7 = arith.constant 0 : index
    %8 = vector.load %arg4[%c0_6, %c0_7] : memref<128x128xf32, #tpu.memory_space<vmem>>, vector<128x128xf32>
    %cst_8 = arith.constant dense<0.000000e+00> : vector<16x128xf32>
    %9 = tpu.matmul %7, %8, %cst_8 {dimension_numbers = #tpu.dot_dimension_numbers<[1], [0], [0], [1], [0, 0, 1, 1], [], []>} : vector<16x128xf32>, vector<128x128xf32>, vector<16x128xf32> -> vector<16x128xf32>
    %c0_9 = arith.constant 0 : index
    %c0_10 = arith.constant 0 : index
    %10 = vector.load %arg5[%c0_9, %c0_10] : memref<1x128xf32, #tpu.memory_space<vmem>>, vector<1x128xf32>
    %11 = vector.broadcast %10 : vector<1x128xf32> to vector<16x128xf32>
    %12 = arith.addf %9, %11 : vector<16x128xf32>
    %c0_11 = arith.constant 0 : index
    %c0_12 = arith.constant 0 : index
    %13 = vector.load %arg6[%c0_11, %c0_12] : memref<16x128xf32, #tpu.memory_space<vmem>>, vector<16x128xf32>
    tpu.vector_store %arg6[%c0_11, %c0_12], %12 {strides = array<i32>} : memref<16x128xf32, #tpu.memory_space<vmem>>, vector<16x128xf32>,
    return
  }
  func.func @transform_0(%arg0: i32) -> (i32, i32) {
    %c0_i32 = arith.constant 0 : i32
    %c0_i32_0 = arith.constant 0 : i32
    return %arg0, %c0_i32 : i32, i32
  }
  func.func @transform_1(%arg0: i32) -> (i32, i32) {
    %c0_i32 = arith.constant 0 : i32
    %c0_i32_0 = arith.constant 0 : i32
    %c0_i32_1 = arith.constant 0 : i32
    return %c0_i32, %c0_i32_0 : i32, i32
  }
  func.func @transform_2(%arg0: i32) -> (i32, i32) {
    %c0_i32 = arith.constant 0 : i32
    %c0_i32_0 = arith.constant 0 : i32
    %c0_i32_1 = arith.constant 0 : i32
    return %c0_i32, %c0_i32_0 : i32, i32
  }
  func.func @transform_3(%arg0: i32) -> (i32, i32) {
    %c0_i32 = arith.constant 0 : i32
    %c0_i32_0 = arith.constant 0 : i32
    %c0_i32_1 = arith.constant 0 : i32
    return %c0_i32, %c0_i32_0 : i32, i32
  }
  func.func @transform_4(%arg0: i32) -> (i32, i32) {
    %c0_i32 = arith.constant 0 : i32
    %c0_i32_0 = arith.constant 0 : i32
    %c0_i32_1 = arith.constant 0 : i32
    return %c0_i32, %c0_i32_0 : i32, i32
  }
  func.func @transform_5(%arg0: i32) -> (i32, i32) {
    %c0_i32 = arith.constant 0 : i32
    %c0_i32_0 = arith.constant 0 : i32
    return %arg0, %c0_i32 : i32, i32
  }
}

</mosaic_0001>

<llo_original>
// kernel: tpu_custom_call.1
$region0: #{tpu_custom_call.1}
  #allocation0 [shape = 'u32[]', space=smem, size = 0x4, offset = 0x4, fixed_abs, tag = 'smem constant byte address 0x4 - core index']
  #allocation1 [shape = 'u32[144,128]{1,0:T(1,128)}', space=vmem, size = 0x12000, scoped, tag = 'internal scratch']
  %s0 = inlined_call_operand.hbm [shape: f32[16,128], index: 0, kind: input, shape index: {}]
  %s1 = inlined_call_operand.hbm [shape: f32[128,128], index: 1, kind: input, shape index: {}]
  %s2 = inlined_call_operand.vmem [shape: f32[1,128], index: 2, kind: input, shape index: {}]
  %s3 = inlined_call_operand.hbm [shape: f32[128,128], index: 3, kind: input, shape index: {}]
  %s4 = inlined_call_operand.vmem [shape: f32[1,128], index: 4, kind: input, shape index: {}]
  %s5 = inlined_call_operand.hbm [shape: f32[16,128], index: 5, kind: output, shape index: {}]
  %s6 = sld [smem:[#allocation0]]
  $region42: #{tpu_custom_call.1} parent=0
    _
  %s8 = ssub.s32 1, %s6
  %s9 = scalar_select 0, %s8, %s6
  $region1: #{tpu_custom_call.1} parent=0
    #allocation2 [shape = 'u8[8192]{0}', space=vmem, size = 0x2000, scoped, tag = 'input window, operand 0, single buffered']
    #allocation3 [shape = 's32[1]{0}', space=sflag, size = 0x4, scoped, tag = 'scoped memory for tpu_custom_call.1']
    #allocation4 [shape = 's32[1]{0}', space=sflag, size = 0x4, scoped, tag = 'scoped memory for tpu_custom_call.1']
    #allocation5 [shape = 'u8[65536]{0}', space=vmem, size = 0x10000, scoped, tag = 'input window, operand 1, single buffered']
    #allocation6 [shape = 's32[1]{0}', space=sflag, size = 0x4, scoped, tag = 'scoped memory for tpu_custom_call.1']
    #allocation7 [shape = 'u8[65536]{0}', space=vmem, size = 0x10000, scoped, tag = 'input window, operand 3, single buffered']
    #allocation8 [shape = 'u8[8192]{0}', space=vmem, size = 0x2000, scoped, tag = 'output window, operand 0, single buffered']
    %10 = vsyncpa [#allocation3], 0
    %11 = vsyncpa [#allocation6], 0
    %12 = vsyncpa [#allocation4], 0
    // Predicated region
    $region2: #{tpu_custom_call.1} parent=1 // pred_check
      _
    $region3: #{tpu_custom_call.1} parent=1 // pred_check_branch
      %14 = sbr.rel (0) target = $region5
    $region4: #{tpu_custom_call.1} parent=1 // pred_region
      %s16 = ssub.s32 256, 256
      %17 = vsyncadd [#allocation3], %s16
      %s18 = sshll.u32 [#allocation2], 4
      %s19 = int_to_ptr.vmem [resolvable:$true] %s18
      %24 = dma.hbm_to_vmem [thread:$0]  %s0, 256, %s19, [#allocation3], 128, 128, 8
    $region5: #{tpu_custom_call.1} parent=1 // pred_fallthru
      _
    // Predicated region
    $region6: #{tpu_custom_call.1} parent=1 // pred_check
      _
    $region7: #{tpu_custom_call.1} parent=1 // pred_check_branch
      %26 = sbr.rel (0) target = $region9
    $region8: #{tpu_custom_call.1} parent=1 // pred_region
      %s28 = ssub.s32 2048, 2048
      %29 = vsyncadd [#allocation6], %s28
      %s30 = sshll.u32 [#allocation5], 4
      %s31 = int_to_ptr.vmem [resolvable:$true] %s30
      %36 = dma.hbm_to_vmem [thread:$0]  %s1, 2048, %s31, [#allocation6], 128, 128, 8
    $region9: #{tpu_custom_call.1} parent=1 // pred_fallthru
      _
    // Predicated region
    $region10: #{tpu_custom_call.1} parent=1 // pred_check
      _
    $region11: #{tpu_custom_call.1} parent=1 // pred_check_branch
      %38 = sbr.rel (0) target = $region13
    $region12: #{tpu_custom_call.1} parent=1 // pred_region
      _
    $region13: #{tpu_custom_call.1} parent=1 // pred_fallthru
      _
    // Predicated region
    $region14: #{tpu_custom_call.1} parent=1 // pred_check
      _
    $region15: #{tpu_custom_call.1} parent=1 // pred_check_branch
      %40 = sbr.rel (0) target = $region17
    $region16: #{tpu_custom_call.1} parent=1 // pred_region
      %s42 = ssub.s32 2048, 2048
      %43 = vsyncadd [#allocation6], %s42
      %s44 = sshll.u32 [#allocation7], 4
      %s45 = int_to_ptr.vmem [resolvable:$true] %s44
      %50 = dma.hbm_to_vmem [thread:$0]  %s3, 2048, %s45, [#allocation6], 128, 128, 8
    $region17: #{tpu_custom_call.1} parent=1 // pred_fallthru
      _
    // Predicated region
    $region18: #{tpu_custom_call.1} parent=1 // pred_check
      _
    $region19: #{tpu_custom_call.1} parent=1 // pred_check_branch
      %52 = sbr.rel (0) target = $region21
    $region20: #{tpu_custom_call.1} parent=1 // pred_region
      _
    $region21: #{tpu_custom_call.1} parent=1 // pred_fallthru
      _
    // Predicated region
    $region22: #{tpu_custom_call.1} parent=1 // pred_check
      _
    $region23: #{tpu_custom_call.1} parent=1 // pred_check_branch
      %54 = sbr.rel (0) target = $region25
    $region24: #{tpu_custom_call.1} parent=1 // pred_region
      %55 = dma.done [#allocation3], 256
    $region25: #{tpu_custom_call.1} parent=1 // pred_fallthru
      _
    // Predicated region
    $region26: #{tpu_custom_call.1} parent=1 // pred_check
      _
    $region27: #{tpu_custom_call.1} parent=1 // pred_check_branch
      %57 = sbr.rel (0) target = $region29
    $region28: #{tpu_custom_call.1} parent=1 // pred_region
      %58 = dma.done [#allocation6], 2048
    $region29: #{tpu_custom_call.1} parent=1 // pred_fallthru
      _
    // Predicated region
    $region30: #{tpu_custom_call.1} parent=1 // pred_check
      _
    $region31: #{tpu_custom_call.1} parent=1 // pred_check_branch
      %60 = sbr.rel (0) target = $region33
    $region32: #{tpu_custom_call.1} parent=1 // pred_region
      %61 = dma.done [#allocation6], 2048
    $region33: #{tpu_custom_call.1} parent=1 // pred_fallthru
      _
    %v62 = vld [vmem:[#allocation2] sm:$0xff]
    %v63 = vld [vmem:[#allocation2 + $0x8] sm:$0xff]
    %v64 = vld [vmem:[#allocation5] sm:$0xff]
    %v65 = vld [vmem:[#allocation5 + $0x8] sm:$0xff]
    %v66 = vld [vmem:[#allocation5 + $0x10] sm:$0xff]
    %v67 = vld [vmem:[#allocation5 + $0x18] sm:$0xff]
    %v68 = vld [vmem:[#allocation5 + $0x20] sm:$0xff]
    %v69 = vld [vmem:[#allocation5 + $0x28] sm:$0xff]
    %v70 = vld [vmem:[#allocation5 + $0x30] sm:$0xff]
    %v71 = vld [vmem:[#allocation5 + $0x38] sm:$0xff]
    %v72 = vld [vmem:[#allocation5 + $0x40] sm:$0xff]
    %v73 = vld [vmem:[#allocation5 + $0x48] sm:$0xff]
    %v74 = vld [vmem:[#allocation5 + $0x50] sm:$0xff]
    %v75 = vld [vmem:[#allocation5 + $0x58] sm:$0xff]
    %v76 = vld [vmem:[#allocation5 + $0x60] sm:$0xff]
    %v77 = vld [vmem:[#allocation5 + $0x68] sm:$0xff]
    %v78 = vld [vmem:[#allocation5 + $0x70] sm:$0xff]
    %v79 = vld [vmem:[#allocation5 + $0x78] sm:$0xff]
    %v80 = vld [vmem:[%s2] sm:$0x1]
    %v82 = vlaneseq
    %v83 = vshrl.u32 %v82, 7
    %v84 = vsub.s32 0, %v83
    %v85 = vrot.slane %v80, %v84
    %87 = vmatprep.subr.mxu0 0.0
    %88 = vmatpush1.msra.mxu0 %v64
    %89 = vmatprep.subr.mxu0 0.0
    %90 = vmatpush1.msra.mxu0 %v65
    %91 = vmatprep.subr.mxu0 0.0
    %92 = vmatpush1.msra.mxu0 %v66
    %93 = vmatprep.subr.mxu0 0.0
    %94 = vmatpush1.msra.mxu0 %v67
    %95 = vmatprep.subr.mxu0 0.0
    %96 = vmatpush1.msra.mxu0 %v68
    %97 = vmatprep.subr.mxu0 0.0
    %98 = vmatpush1.msra.mxu0 %v69
    %99 = vmatprep.subr.mxu0 0.0
    %100 = vmatpush1.msra.mxu0 %v70
    %101 = vmatprep.subr.mxu0 0.0
    %102 = vmatpush1.msra.mxu0 %v71
    %103 = vmatprep.subr.mxu0 0.0
    %104 = vmatpush1.msra.mxu0 %v72
    %105 = vmatprep.subr.mxu0 0.0
    %106 = vmatpush1.msra.mxu0 %v73
    %107 = vmatprep.subr.mxu0 0.0
    %108 = vmatpush1.msra.mxu0 %v74
    %109 = vmatprep.subr.mxu0 0.0
    %110 = vmatpush1.msra.mxu0 %v75
    %111 = vmatprep.subr.mxu0 0.0
    %112 = vmatpush1.msra.mxu0 %v76
    %113 = vmatprep.subr.mxu0 0.0
    %114 = vmatpush1.msra.mxu0 %v77
    %115 = vmatprep.subr.mxu0 0.0
    %116 = vmatpush1.msra.mxu0 %v78
    %117 = vmatprep.subr.mxu0 0.0
    %118 = vmatpush1.msra.mxu0 %v79
    %119 = vmatprep.subr.mxu0 0.0
    %120 = vmatpush1.msra.mxu0 0.0
    %121 = vmatprep.subr.mxu0 0.0
    %122 = vmatpush1.msra.mxu0 0.0
    %123 = vmatprep.subr.mxu0 0.0
    %124 = vmatpush1.msra.mxu0 0.0
    %125 = vmatprep.subr.mxu0 0.0
    %126 = vmatpush1.msra.mxu0 0.0
    %127 = vmatprep.subr.mxu0 0.0
    %128 = vmatpush1.msra.mxu0 0.0
    %129 = vmatprep.subr.mxu0 0.0
    %130 = vmatpush1.msra.mxu0 0.0
    %131 = vmatprep.subr.mxu0 0.0
    %132 = vmatpush1.msra.mxu0 0.0
    %133 = vmatprep.subr.mxu0 0.0
    %134 = vmatpush1.msra.mxu0 0.0
    %135 = vmatprep.subr.mxu0 0.0
    %136 = vmatpush1.msra.mxu0 0.0
    %137 = vmatprep.subr.mxu0 0.0
    %138 = vmatpush1.msra.mxu0 0.0
    %139 = vmatprep.subr.mxu0 0.0
    %140 = vmatpush1.msra.mxu0 0.0
    %141 = vmatprep.subr.mxu0 0.0
    %142 = vmatpush1.msra.mxu0 0.0
    %143 = vmatprep.subr.mxu0 0.0
    %144 = vmatpush1.msra.mxu0 0.0
    %145 = vmatprep.subr.mxu0 0.0
    %146 = vmatpush1.msra.mxu0 0.0
    %147 = vmatprep.subr.mxu0 0.0
    %148 = vmatpush1.msra.mxu0 0.0
    %149 = vmatprep.subr.mxu0 0.0
    %150 = vmatpush1.msra.mxu0 0.0
    %151 = vmatprep.mubr.f32.mxu0 0.0
    %152 = vmatmul.mubr.f32.gmra.mrb[0].mxu0 %v62
    %v153 = vpop.f32.mrb[0].mxu0
    %v154 = vadd.f32 %v85, %v153
    %v155 = vpop.f32.mrb[0].mxu0
    %156 = vmatprep.mubr.f32.mxu0 0.0
    %157 = vmatmul.mubr.f32.gmra.mrb[0].mxu0 %v63
    %v158 = vpop.f32.mrb[0].mxu0
    %v159 = vadd.f32 %v85, %v158
    %v160 = vpop.f32.mrb[0].mxu0
    %161 = vdwg.mxu0
    %v162 = vmax.f32 %v154, 0.0
    %v163 = vmax.f32 %v159, 0.0
    %v164 = vld [vmem:[#allocation7] sm:$0xff]
    %v165 = vld [vmem:[#allocation7 + $0x8] sm:$0xff]
    %v166 = vld [vmem:[#allocation7 + $0x10] sm:$0xff]
    %v167 = vld [vmem:[#allocation7 + $0x18] sm:$0xff]
    %v168 = vld [vmem:[#allocation7 + $0x20] sm:$0xff]
    %v169 = vld [vmem:[#allocation7 + $0x28] sm:$0xff]
    %v170 = vld [vmem:[#allocation7 + $0x30] sm:$0xff]
    %v171 = vld [vmem:[#allocation7 + $0x38] sm:$0xff]
    %v172 = vld [vmem:[#allocation7 + $0x40] sm:$0xff]
    %v173 = vld [vmem:[#allocation7 + $0x48] sm:$0xff]
    %v174 = vld [vmem:[#allocation7 + $0x50] sm:$0xff]
    %v175 = vld [vmem:[#allocation7 + $0x58] sm:$0xff]
    %v176 = vld [vmem:[#allocation7 + $0x60] sm:$0xff]
    %v177 = vld [vmem:[#allocation7 + $0x68] sm:$0xff]
    %v178 = vld [vmem:[#allocation7 + $0x70] sm:$0xff]
    %v179 = vld [vmem:[#allocation7 + $0x78] sm:$0xff]
    %v180 = vld [vmem:[%s4] sm:$0x1]
    %v182 = vlaneseq
    %v183 = vshrl.u32 %v182, 7
    %v184 = vsub.s32 0, %v183
    %v185 = vrot.slane %v180, %v184
    %187 = vmatprep.subr.mxu0 0.0
    %188 = vmatpush1.msra.mxu0 %v164
    %189 = vmatprep.subr.mxu0 0.0
    %190 = vmatpush1.msra.mxu0 %v165
    %191 = vmatprep.subr.mxu0 0.0
    %192 = vmatpush1.msra.mxu0 %v166
    %193 = vmatprep.subr.mxu0 0.0
    %194 = vmatpush1.msra.mxu0 %v167
    %195 = vmatprep.subr.mxu0 0.0
    %196 = vmatpush1.msra.mxu0 %v168
    %197 = vmatprep.subr.mxu0 0.0
    %198 = vmatpush1.msra.mxu0 %v169
    %199 = vmatprep.subr.mxu0 0.0
    %200 = vmatpush1.msra.mxu0 %v170
    %201 = vmatprep.subr.mxu0 0.0
    %202 = vmatpush1.msra.mxu0 %v171
    %203 = vmatprep.subr.mxu0 0.0
    %204 = vmatpush1.msra.mxu0 %v172
    %205 = vmatprep.subr.mxu0 0.0
    %206 = vmatpush1.msra.mxu0 %v173
    %207 = vmatprep.subr.mxu0 0.0
    %208 = vmatpush1.msra.mxu0 %v174
    %209 = vmatprep.subr.mxu0 0.0
    %210 = vmatpush1.msra.mxu0 %v175
    %211 = vmatprep.subr.mxu0 0.0
    %212 = vmatpush1.msra.mxu0 %v176
    %213 = vmatprep.subr.mxu0 0.0
    %214 = vmatpush1.msra.mxu0 %v177
    %215 = vmatprep.subr.mxu0 0.0
    %216 = vmatpush1.msra.mxu0 %v178
    %217 = vmatprep.subr.mxu0 0.0
    %218 = vmatpush1.msra.mxu0 %v179
    %219 = vmatprep.subr.mxu0 0.0
    %220 = vmatpush1.msra.mxu0 0.0
    %221 = vmatprep.subr.mxu0 0.0
    %222 = vmatpush1.msra.mxu0 0.0
    %223 = vmatprep.subr.mxu0 0.0
    %224 = vmatpush1.msra.mxu0 0.0
    %225 = vmatprep.subr.mxu0 0.0
    %226 = vmatpush1.msra.mxu0 0.0
    %227 = vmatprep.subr.mxu0 0.0
    %228 = vmatpush1.msra.mxu0 0.0
    %229 = vmatprep.subr.mxu0 0.0
    %230 = vmatpush1.msra.mxu0 0.0
    %231 = vmatprep.subr.mxu0 0.0
    %232 = vmatpush1.msra.mxu0 0.0
    %233 = vmatprep.subr.mxu0 0.0
    %234 = vmatpush1.msra.mxu0 0.0
    %235 = vmatprep.subr.mxu0 0.0
    %236 = vmatpush1.msra.mxu0 0.0
    %237 = vmatprep.subr.mxu0 0.0
    %238 = vmatpush1.msra.mxu0 0.0
    %239 = vmatprep.subr.mxu0 0.0
    %240 = vmatpush1.msra.mxu0 0.0
    %241 = vmatprep.subr.mxu0 0.0
    %242 = vmatpush1.msra.mxu0 0.0
    %243 = vmatprep.subr.mxu0 0.0
    %244 = vmatpush1.msra.mxu0 0.0
    %245 = vmatprep.subr.mxu0 0.0
    %246 = vmatpush1.msra.mxu0 0.0
    %247 = vmatprep.subr.mxu0 0.0
    %248 = vmatpush1.msra.mxu0 0.0
    %249 = vmatprep.subr.mxu0 0.0
    %250 = vmatpush1.msra.mxu0 0.0
    %251 = vmatprep.mubr.f32.mxu0 0.0
    %252 = vmatmul.mubr.f32.gmra.mrb[0].mxu0 %v162
    %v253 = vpop.f32.mrb[0].mxu0
    %v254 = vadd.f32 %v185, %v253
    %v255 = vpop.f32.mrb[0].mxu0
    %256 = vmatprep.mubr.f32.mxu0 0.0
    %257 = vmatmul.mubr.f32.gmra.mrb[0].mxu0 %v163
    %v258 = vpop.f32.mrb[0].mxu0
    %v259 = vadd.f32 %v185, %v258
    %v260 = vpop.f32.mrb[0].mxu0
    %261 = vdwg.mxu0
    %262 = vst [vmem:[#allocation8] sm:$0xff] %v254
    %263 = vst [vmem:[#allocation8 + $0x8] sm:$0xff] %v259
    // Predicated region
    $region34: #{tpu_custom_call.1} parent=1 // pred_check
      _
    $region35: #{tpu_custom_call.1} parent=1 // pred_check_branch
      %265 = sbr.rel (0) target = $region37
    $region36: #{tpu_custom_call.1} parent=1 // pred_region
      %s267 = ssub.s32 256, 256
      %268 = vsyncadd [#allocation4], %s267
      %s269 = sshll.u32 [#allocation8], 4
      %s270 = int_to_ptr.vmem [resolvable:$true] %s269
      %275 = dma.vmem_to_hbm [thread:$0]  %s270, 256, %s5, [#allocation4], 128, 128, 8
    $region37: #{tpu_custom_call.1} parent=1 // pred_fallthru
      _
    // Predicated region
    $region38: #{tpu_custom_call.1} parent=1 // pred_check
      _
    $region39: #{tpu_custom_call.1} parent=1 // pred_check_branch
      %277 = sbr.rel (0) target = $region41
    $region40: #{tpu_custom_call.1} parent=1 // pred_region
      %278 = dma.done [#allocation4], 256
    $region41: #{tpu_custom_call.1} parent=1 // pred_fallthru
      _
    %279 = vsyncpa [#allocation3], 1
    %280 = vsyncpa [#allocation6], 1
    %281 = vsyncpa [#allocation4], 1

</llo_original>
